<compile_context>
chip_gen: v5e
topology: v5e:2x2
jax: 0.10.0
libtpu: 0.0.40
codegen_flags: <defaults>
</compile_context>

<pallas_src>
import jax
import jax.numpy as jnp
from jax.experimental import pallas as pl
from jax.experimental.pallas import tpu as pltpu

C_IN = 3
C_OUT = 64
K = 3
KTAPS = K * K * C_IN            # 27 taps per output pixel
KPAD = 32                       # taps zero-padded to 32 per pixel (aligned loads)
PACK = 4                        # output pixels packed per row -> LHS minor = 128
MAX_TILE_ROWS = 1024            # packed rows per grid step (sweet spot 512-2048)
ROW_ALIGN = 16                  # row-tile multiple valid for both f32 and bf16 LHS


def _conv_mm_kernel(lhs_ref, rhs_ref, bias_ref, o_ref):
    # lhs_ref : (tile_rows, PACK*KPAD) = (tile_rows, 128)   im2col patches, 4 px/row
    # rhs_ref : (PACK*KPAD, PACK*C_OUT) = (128, 256)        block-diagonal weights
    # bias_ref: (1, PACK*C_OUT) f32                         bias, added in f32 (VPU)
    # o_ref   : (tile_rows, PACK*C_OUT)                     lane-dense output
    acc = jnp.dot(lhs_ref[...], rhs_ref[...], preferred_element_type=jnp.float32)
    o_ref[...] = (acc + bias_ref[...]).astype(o_ref.dtype)


def conv2d_pallas_nhwc(x_nhwc, w_kkio, bias, *, mxu_dtype=jnp.bfloat16,
                       max_tile_rows=MAX_TILE_ROWS, out_dtype=None):
    """x_nhwc: (N, H, W, 3); w_kkio: (3, 3, 3, 64) [HWIO]; bias: (64,).

    Returns (N, OH, OW, 64). Layout-native path (no transposes)."""
    n, h, w, c = x_nhwc.shape
    assert c == C_IN
    oh, ow = h - K + 1, w - K + 1
    r = n * oh * ow
    out_dtype = x_nhwc.dtype if out_dtype is None else out_dtype

    # ---- im2col in the wrapper (XLA): 9 static slices + concat, tap order
    # (kh, kw, c) matches w_kkio.reshape(KTAPS, C_OUT). ----
    taps = [x_nhwc[:, kh:kh + oh, kw:kw + ow, :]
            for kh in range(K) for kw in range(K)]
    patches = jnp.concatenate(taps, axis=-1).reshape(r, KTAPS)         # (R, 27)
    patches = jnp.pad(patches, ((0, 0), (0, KPAD - KTAPS)))            # (R, 32)

    # ---- tile sizing: as big as possible (amortize per-step overhead) while
    # keeping the parallel grid >= 2 steps for v7x's two TensorCores. ----
    needed_packed = pl.cdiv(r, PACK)                                   # packed rows
    half = -(-((needed_packed + 1) // 2) // ROW_ALIGN) * ROW_ALIGN
    tile_rows = max(ROW_ALIGN, min(max_tile_rows, half))
    assert tile_rows % ROW_ALIGN == 0, tile_rows                       # f32/bf16 tiling
    packed_rows = pl.cdiv(needed_packed, tile_rows) * tile_rows
    r_pad = packed_rows * PACK

    # ---- pack PACK pixels per row: (packed_rows, 128) LHS, lane-dense. ----
    lhs = jnp.pad(patches, ((0, r_pad - r), (0, 0)))
    lhs = lhs.reshape(packed_rows, PACK * KPAD).astype(mxu_dtype)      # (Rp/4, 128)

    w_flat = w_kkio.reshape(KTAPS, C_OUT)                              # (27, 64)
    w_pad = jnp.pad(w_flat, ((0, KPAD - KTAPS), (0, 0)))               # (32, 64)
    rhs = jax.scipy.linalg.block_diag(*([w_pad] * PACK)).astype(mxu_dtype)  # (128, 256)
    bias_row = jnp.tile(bias.astype(jnp.float32).reshape(1, C_OUT), (1, PACK))  # (1, 256)

    grid = packed_rows // tile_rows
    out_packed = pl.pallas_call(
        _conv_mm_kernel,
        out_shape=jax.ShapeDtypeStruct((packed_rows, PACK * C_OUT), out_dtype),
        grid_spec=pltpu.PrefetchScalarGridSpec(
            num_scalar_prefetch=0,
            grid=(grid,),
            in_specs=[
                pl.BlockSpec((tile_rows, PACK * KPAD), lambda i: (i, 0)),
                pl.BlockSpec((PACK * KPAD, PACK * C_OUT), lambda i: (0, 0)),
                pl.BlockSpec((1, PACK * C_OUT), lambda i: (0, 0)),
            ],
            out_specs=pl.BlockSpec((tile_rows, PACK * C_OUT), lambda i: (i, 0)),
        ),
        compiler_params=pltpu.CompilerParams(
            dimension_semantics=("parallel",)),
    )(lhs, rhs, bias_row)

    out = out_packed.reshape(r_pad, C_OUT)[:r]                         # (R, 64)
    return out.reshape(n, oh, ow, C_OUT)


def conv2d_pallas(x_nchw, w_kkio, bias, **kwargs):
    """NCHW wrapper keeping nn.Conv2d(3, 64, 3) forward semantics."""
    x_nhwc = jnp.transpose(x_nchw, (0, 2, 3, 1))
    out_nhwc = conv2d_pallas_nhwc(x_nhwc, w_kkio, bias, **kwargs)
    return jnp.transpose(out_nhwc, (0, 3, 1, 2))                       # NCHW


if __name__ == "__main__":
    key = jax.random.PRNGKey(0)
    kx, kw, kb = jax.random.split(key, 3)

    # Deterministic synthetic parameters (same shapes as nn.Conv2d(3, 64, 3)).
    x = jax.random.normal(kx, (2, C_IN, 16, 16), dtype=jnp.float32)
    w = jax.random.normal(kw, (K, K, C_IN, C_OUT), dtype=jnp.float32) * 0.1
    b = jax.random.normal(kb, (C_OUT,), dtype=jnp.float32) * 0.1

    # XLA reference (weights converted to OIHW).
    w_oihw = jnp.transpose(w, (3, 2, 0, 1))
    ref = jax.lax.conv_general_dilated(
        x, w_oihw, window_strides=(1, 1), padding="VALID",
        dimension_numbers=("NCHW", "OIHW", "NCHW"))
    ref = ref + b.reshape(1, C_OUT, 1, 1)

    # f32-operand path (exact-precision check).
    out_f32 = conv2d_pallas(x, w, b, mxu_dtype=jnp.float32)
    out_f32 = jax.block_until_ready(out_f32)
    assert out_f32.shape == (2, C_OUT, 14, 14), out_f32.shape
    assert jnp.allclose(out_f32, ref, atol=2e-4, rtol=2e-4)

    # Default path: bf16 MXU operands, f32 accumulate, f32 bias add in-kernel.
    out = conv2d_pallas(x, w, b)
    out = jax.block_until_ready(out)
    assert out.shape == (2, C_OUT, 14, 14), out.shape
    assert jnp.allclose(out, ref, atol=5e-2, rtol=5e-2)

    print("KERNEL_OK")
</pallas_src>

<mosaic_0001>
module attributes {stable_mosaic.version = 11 : i64} {
  func.func @_conv_mm_kernel(%arg0: i32, %arg1: memref<64x128xf32, #tpu.memory_space<vmem>>, %arg2: memref<128x256xf32, #tpu.memory_space<vmem>>, %arg3: memref<1x256xf32, #tpu.memory_space<vmem>>, %arg4: memref<64x256xf32, #tpu.memory_space<vmem>>) attributes {dimension_semantics = [#tpu.dimension_semantics<parallel>], iteration_bounds = array<i64: 2>, scalar_prefetch = 0 : i64, scratch_operands = 0 : i64, tpu.core_type = #tpu.core_type<tc>, window_params = [{transform_indices = @transform_0, window_bounds = array<i64: 64, 128>}, {pipeline_mode = #tpu.pipeline_mode<synchronous>, transform_indices = @transform_1, window_bounds = array<i64: 128, 256>}, {pipeline_mode = #tpu.pipeline_mode<synchronous>, transform_indices = @transform_2, window_bounds = array<i64: 1, 256>}, {transform_indices = @transform_3, window_bounds = array<i64: 64, 256>}]} {
    %c0 = arith.constant 0 : index
    %c0_0 = arith.constant 0 : index
    %0 = vector.load %arg1[%c0, %c0_0] : memref<64x128xf32, #tpu.memory_space<vmem>>, vector<64x128xf32>
    %c0_1 = arith.constant 0 : index
    %c0_2 = arith.constant 0 : index
    %1 = vector.load %arg2[%c0_1, %c0_2] : memref<128x256xf32, #tpu.memory_space<vmem>>, vector<128x256xf32>
    %cst = arith.constant dense<0.000000e+00> : vector<64x256xf32>
    %2 = tpu.matmul %0, %1, %cst {dimension_numbers = #tpu.dot_dimension_numbers<[1], [0], [0], [1], [0, 0, 1, 1], [], []>} : vector<64x128xf32>, vector<128x256xf32>, vector<64x256xf32> -> vector<64x256xf32>
    %c0_3 = arith.constant 0 : index
    %c0_4 = arith.constant 0 : index
    %3 = vector.load %arg3[%c0_3, %c0_4] : memref<1x256xf32, #tpu.memory_space<vmem>>, vector<1x256xf32>
    %4 = vector.broadcast %3 : vector<1x256xf32> to vector<64x256xf32>
    %5 = arith.addf %2, %4 : vector<64x256xf32>
    %c0_5 = arith.constant 0 : index
    %c0_6 = arith.constant 0 : index
    %6 = vector.load %arg4[%c0_5, %c0_6] : memref<64x256xf32, #tpu.memory_space<vmem>>, vector<64x256xf32>
    tpu.vector_store %arg4[%c0_5, %c0_6], %5 {strides = array<i32>} : memref<64x256xf32, #tpu.memory_space<vmem>>, vector<64x256xf32>,
    return
  }
  func.func @transform_0(%arg0: i32) -> (i32, i32) {
    %c0_i32 = arith.constant 0 : i32
    %c0_i32_0 = arith.constant 0 : i32
    return %arg0, %c0_i32 : i32, i32
  }
  func.func @transform_1(%arg0: i32) -> (i32, i32) {
    %c0_i32 = arith.constant 0 : i32
    %c0_i32_0 = arith.constant 0 : i32
    %c0_i32_1 = arith.constant 0 : i32
    return %c0_i32, %c0_i32_0 : i32, i32
  }
  func.func @transform_2(%arg0: i32) -> (i32, i32) {
    %c0_i32 = arith.constant 0 : i32
    %c0_i32_0 = arith.constant 0 : i32
    %c0_i32_1 = arith.constant 0 : i32
    return %c0_i32, %c0_i32_0 : i32, i32
  }
  func.func @transform_3(%arg0: i32) -> (i32, i32) {
    %c0_i32 = arith.constant 0 : i32
    %c0_i32_0 = arith.constant 0 : i32
    return %arg0, %c0_i32 : i32, i32
  }
}

</mosaic_0001>

<llo_original>
// kernel: tpu_custom_call.1
$region0: #{tpu_custom_call.1}
  #allocation0 [shape = 'u32[]', space=smem, size = 0x4, offset = 0x4, fixed_abs, tag = 'smem constant byte address 0x4 - core index']
  #allocation1 [shape = 'u32[72,128]{1,0:T(1,128)}', space=vmem, size = 0x9000, scoped, tag = 'internal scratch']
  %s0 = inlined_call_operand.hbm [shape: f32[128,128], index: 0, kind: input, shape index: {}]
  %s1 = inlined_call_operand.hbm [shape: f32[128,256], index: 1, kind: input, shape index: {}]
  %s2 = inlined_call_operand.hbm [shape: f32[1,256], index: 2, kind: input, shape index: {}]
  %s3 = inlined_call_operand.hbm [shape: f32[128,256], index: 3, kind: output, shape index: {}]
  %s4 = sld [smem:[#allocation0]]
  $region57: #{tpu_custom_call.1} parent=0
    _
  %s6 = ssub.s32 1, %s4
  %s7 = scalar_select 0, %s6, %s4
  $region1: #{tpu_custom_call.1} parent=0
    #allocation2 [shape = 'u8[65536]{0}', space=vmem, size = 0x10000, scoped, tag = 'input window, operand 0']
    #allocation3 [shape = 's32[2]{0}', space=sflag, size = 0x8, scoped, tag = 'scoped memory for tpu_custom_call.1']
    #allocation4 [shape = 's32[2]{0}', space=sflag, size = 0x8, scoped, tag = 'scoped memory for tpu_custom_call.1']
    #allocation5 [shape = 'u8[131072]{0}', space=vmem, size = 0x20000, scoped, tag = 'input window, operand 1, single buffered']
    #allocation6 [shape = 's32[1]{0}', space=sflag, size = 0x4, scoped, tag = 'scoped memory for tpu_custom_call.1']
    #allocation7 [shape = 'u8[1024]{0}', space=vmem, size = 0x400, scoped, tag = 'input window, operand 2, single buffered']
    #allocation8 [shape = 'u8[131072]{0}', space=vmem, size = 0x20000, scoped, tag = 'output window, operand 0']
    %8 = vsyncpa [#allocation3], 0
    %s9 = scalar_lea.sflag [#allocation3], 1
    %10 = vsyncpa %s9, 0
    %11 = vsyncpa [#allocation6], 0
    %12 = vsyncpa [#allocation4], 0
    %s13 = scalar_lea.sflag [#allocation4], 1
    %14 = vsyncpa %s13, 0
    loop: start=0, step=1, limit=4
    $region2: #{tpu_custom_call.1} parent=1 // loop_pre_header
      _
    $region3: #{tpu_custom_call.1} parent=1 // loop_header
      %s16 = sphi 0, %s20
      %p17 = scmp.ge.s32.totalorder %s16, 4
      %s26 = sphi 0, %s28
      %s29 = sphi 0, %s26
      %s30 = sphi 0, %s29
      %s46 = sphi 0, %s30
      %s50 = sphi 0, %s50
      %s52 = sphi 0, %s50
      %s53 = sphi 0, %s52
      %s67 = sphi 0, %s53
      %s71 = sphi 0, %s71
      %s73 = sphi 0, %s71
      %s74 = sphi 0, %s73
      %s88 = sphi 0, %s74
      %s94 = sphi 0, %s96
      %s97 = sphi 0, %s94
      %s98 = sphi 0, %s97
      %s114 = sphi 0, %s98
    $region4: #{tpu_custom_call.1} parent=1 // loop_header_branch
      %19 = sbr.rel (%p17) target = $region8
    $region5: #{tpu_custom_call.1} parent=1 // loop_body
      %s21 = ssub.s32 %s16, 1
      %s22 = ssub.s32 %s16, 2
      %s23 = sadd.s32 %s16, 1
      %s24 = ssub.s32 %s16, %s23
      %p25 = scmp.eq.s32.totalorder %s24, 0
      %s27 = sadd.s32 %s26, 1
      %s28 = scalar_select %p25, %s26, %s27
      %p31 = pneg %p25
      %p32 = scmp.eq.s32.totalorder %s16, 1
      %p33 = por %p31, %p32
      %p34 = scmp.ne.s32.totalorder %s26, %s29
      %p35 = scmp.eq.s32.totalorder %s16, 0
      %p36 = por %p34, %p35
      %p37 = scmp.ne.s32.totalorder %s26, %s29
      %p38 = scmp.eq.s32.totalorder %s21, 1
      %p39 = por %p37, %p38
      %p40 = scmp.ne.s32.totalorder %s29, %s30
      %p41 = scmp.eq.s32.totalorder %s21, 0
      %p42 = por %p40, %p41
      %p43 = scmp.ne.s32.totalorder %s29, %s30
      %p44 = scmp.eq.s32.totalorder %s22, 1
      %p45 = por %p43, %p44
      %p47 = scmp.ne.s32.totalorder %s30, %s46
      %p48 = scmp.eq.s32.totalorder %s22, 0
      %p49 = por %p47, %p48
      %s51 = sadd.s32 %s50, 1
      %p54 = scmp.eq.s32.totalorder %s16, 1
      %p55 = scmp.ne.s32.totalorder %s50, %s52
      %p56 = scmp.eq.s32.totalorder %s16, 0
      %p57 = por %p55, %p56
      %p58 = scmp.ne.s32.totalorder %s50, %s52
      %p59 = scmp.eq.s32.totalorder %s21, 1
      %p60 = por %p58, %p59
      %p61 = scmp.ne.s32.totalorder %s52, %s53
      %p62 = scmp.eq.s32.totalorder %s21, 0
      %p63 = por %p61, %p62
      %p64 = scmp.ne.s32.totalorder %s52, %s53
      %p65 = scmp.eq.s32.totalorder %s22, 1
      %p66 = por %p64, %p65
      %p68 = scmp.ne.s32.totalorder %s53, %s67
      %p69 = scmp.eq.s32.totalorder %s22, 0
      %p70 = por %p68, %p69
      %s72 = sadd.s32 %s71, 1
      %p75 = scmp.eq.s32.totalorder %s16, 1
      %p76 = scmp.ne.s32.totalorder %s71, %s73
      %p77 = scmp.eq.s32.totalorder %s16, 0
      %p78 = por %p76, %p77
      %p79 = scmp.ne.s32.totalorder %s71, %s73
      %p80 = scmp.eq.s32.totalorder %s21, 1
      %p81 = por %p79, %p80
      %p82 = scmp.ne.s32.totalorder %s73, %s74
      %p83 = scmp.eq.s32.totalorder %s21, 0
      %p84 = por %p82, %p83
      %p85 = scmp.ne.s32.totalorder %s73, %s74
      %p86 = scmp.eq.s32.totalorder %s22, 1
      %p87 = por %p85, %p86
      %p89 = scmp.ne.s32.totalorder %s74, %s88
      %p90 = scmp.eq.s32.totalorder %s22, 0
      %p91 = por %p89, %p90
      %s92 = ssub.s32 %s16, %s23
      %p93 = scmp.eq.s32.totalorder %s92, 0
      %s95 = sadd.s32 %s94, 1
      %s96 = scalar_select %p93, %s94, %s95
      %p99 = pneg %p93
      %p100 = scmp.eq.s32.totalorder %s16, 1
      %p101 = por %p99, %p100
      %p102 = scmp.ne.s32.totalorder %s94, %s97
      %p103 = scmp.eq.s32.totalorder %s16, 0
      %p104 = por %p102, %p103
      %p105 = scmp.ne.s32.totalorder %s94, %s97
      %p106 = scmp.eq.s32.totalorder %s21, 1
      %p107 = por %p105, %p106
      %p108 = scmp.ne.s32.totalorder %s97, %s98
      %p109 = scmp.eq.s32.totalorder %s21, 0
      %p110 = por %p108, %p109
      %p111 = scmp.ne.s32.totalorder %s97, %s98
      %p112 = scmp.eq.s32.totalorder %s22, 1
      %p113 = por %p111, %p112
      %p115 = scmp.ne.s32.totalorder %s98, %s114
      %p116 = scmp.eq.s32.totalorder %s22, 0
      %p117 = por %p115, %p116
      %p118 = scmp.le.s32.totalorder 1, %s16
      %p119 = scmp.lt.s32.totalorder %s16, 3
      %p120 = pnand %p118, %p119
      %p121 = pneg %p120
      // Predicated region
      $region9: #{tpu_custom_call.1} parent=5 // pred_check
        _
      $region10: #{tpu_custom_call.1} parent=5 // pred_check_branch
        %123 = sbr.rel (%p120) target = $region12
      $region11: #{tpu_custom_call.1} parent=5 // pred_region
        %s124 = ssub.s32 %s16, 1
        // Predicated region
        $region13: #{tpu_custom_call.1} parent=11 // pred_check
          %p125 = pneg %p63
        $region14: #{tpu_custom_call.1} parent=11 // pred_check_branch
          %127 = sbr.rel (%p125) target = $region16
        $region15: #{tpu_custom_call.1} parent=11 // pred_region
          %129 = vsyncadd [#allocation6], 0
          %s130 = sshll.u32 %s1, 4
          %s131 = int_to_ptr.hbm [resolvable:$true] %s130
          %s132 = sshll.u32 [#allocation5], 4
          %s133 = int_to_ptr.vmem [resolvable:$true] %s132
          %138 = dma.hbm_to_vmem [thread:$0]  %s131, 4096, %s133, [#allocation6], 256, 256, 16
        $region16: #{tpu_custom_call.1} parent=11 // pred_fallthru
          _
        // Predicated region
        $region17: #{tpu_custom_call.1} parent=11 // pred_check
          %p139 = pneg %p84
        $region18: #{tpu_custom_call.1} parent=11 // pred_check_branch
          %141 = sbr.rel (%p139) target = $region20
        $region19: #{tpu_custom_call.1} parent=11 // pred_region
          %143 = vsyncadd [#allocation6], 0
          %s145 = sshll.u32 %s2, 4
          %s146 = int_to_ptr.hbm [resolvable:$true] %s145
          %s147 = sshll.u32 [#allocation7], 4
          %s148 = int_to_ptr.vmem [resolvable:$true] %s147
          %150 = dma.hbm_to_vmem [thread:$0]  %s146, 32, %s148, [#allocation6]
        $region20: #{tpu_custom_call.1} parent=11 // pred_fallthru
          _
      $region12: #{tpu_custom_call.1} parent=5 // pred_fallthru
        _
      %p151 = scmp.lt.s32.totalorder %s16, 2
      // Predicated region
      $region21: #{tpu_custom_call.1} parent=5 // pred_check
        %p152 = pneg %p151
      $region22: #{tpu_custom_call.1} parent=5 // pred_check_branch
        %154 = sbr.rel (%p152) target = $region24
      $region23: #{tpu_custom_call.1} parent=5 // pred_region
        // Predicated region
        $region25: #{tpu_custom_call.1} parent=23 // pred_check
          %p155 = pneg %p36
        $region26: #{tpu_custom_call.1} parent=23 // pred_check_branch
          %157 = sbr.rel (%p155) target = $region28
        $region27: #{tpu_custom_call.1} parent=23 // pred_region
          %s158 = sand.u32 %s26, 1
          %s159 = scalar_lea.sflag [#allocation3], %s158
          %s160 = sand.u32 %s26, 1
          %s161 = smul.addr %s160, 64
          %s162 = scalar_lea.vmem [#allocation2], %s161
          %s163 = smul.u32 8, %s16
          %165 = vsyncadd %s159, 0
          %s166 = smul.addr %s163, 8
          %s167 = scalar_lea.hbm %s0, %s166
          %s168 = sshll.u32 %s167, 4
          %s169 = int_to_ptr.hbm [resolvable:$true] %s168
          %s170 = sshll.u32 %s162, 4
          %s171 = int_to_ptr.vmem [resolvable:$true] %s170
          %176 = dma.hbm_to_vmem [thread:$0]  %s169, 1024, %s171, %s159, 128, 128, 8
        $region28: #{tpu_custom_call.1} parent=23 // pred_fallthru
          _
      $region24: #{tpu_custom_call.1} parent=5 // pred_fallthru
        _
      %p177 = scmp.le.s32.totalorder 1, %s16
      %p178 = scmp.lt.s32.totalorder %s16, 3
      %p179 = pnand %p177, %p178
      %p180 = pneg %p179
      // Predicated region
      $region29: #{tpu_custom_call.1} parent=5 // pred_check
        _
      $region30: #{tpu_custom_call.1} parent=5 // pred_check_branch
        %182 = sbr.rel (%p179) target = $region32
      $region31: #{tpu_custom_call.1} parent=5 // pred_region
        %s183 = ssub.s32 %s16, 1
        %s184 = sand.u32 %s29, 1
        %s185 = scalar_lea.sflag [#allocation3], %s184
        %s186 = sand.u32 %s29, 1
        %s187 = smul.addr %s186, 64
        %s188 = scalar_lea.vmem [#allocation2], %s187
        // Predicated region
        $region33: #{tpu_custom_call.1} parent=31 // pred_check
          %p189 = pneg %p42
        $region34: #{tpu_custom_call.1} parent=31 // pred_check_branch
          %191 = sbr.rel (%p189) target = $region36
        $region35: #{tpu_custom_call.1} parent=31 // pred_region
          %193 = dma.done %s185, 1024
        $region36: #{tpu_custom_call.1} parent=31 // pred_fallthru
          _
        // Predicated region
        $region37: #{tpu_custom_call.1} parent=31 // pred_check
          %p194 = pneg %p63
        $region38: #{tpu_custom_call.1} parent=31 // pred_check_branch
          %196 = sbr.rel (%p194) target = $region40
        $region39: #{tpu_custom_call.1} parent=31 // pred_region
          %198 = dma.done [#allocation6], 4096
        $region40: #{tpu_custom_call.1} parent=31 // pred_fallthru
          _
        // Predicated region
        $region41: #{tpu_custom_call.1} parent=31 // pred_check
          %p199 = pneg %p84
        $region42: #{tpu_custom_call.1} parent=31 // pred_check_branch
          %201 = sbr.rel (%p199) target = $region44
        $region43: #{tpu_custom_call.1} parent=31 // pred_region
          %203 = dma.done [#allocation6], 32
        $region44: #{tpu_custom_call.1} parent=31 // pred_fallthru
          _
        %s204 = sand.u32 %s29, 1
        %s205 = scalar_lea.sflag [#allocation3], %s204
        %s206 = sand.u32 %s29, 1
        %s207 = smul.addr %s206, 64
        %s208 = scalar_lea.vmem [#allocation2], %s207
        %p209 = pneg %p42
        %p210 = pneg %p39
        %p211 = pneg %p63
        %p212 = pneg %p60
        %p213 = pneg %p84
        %p214 = pneg %p81
        %p215 = pneg %p110
        %p216 = pneg %p107
        %s217 = sand.u32 %s97, 1
        %s218 = scalar_lea.sflag [#allocation4], %s217
        %s219 = sand.u32 %s97, 1
        %s220 = smul.addr %s219, 128
        %s221 = scalar_lea.vmem [#allocation8], %s220
        %s222 = smul.u32 8, %s21
        %s223 = smul.u32 8, %s21
        %v224 = vld [vmem:[%s188] sm:$0xff]
        %v225 = vld [vmem:[%s188 + $0x8] sm:$0xff]
        %v226 = vld [vmem:[%s188 + $0x10] sm:$0xff]
        %v227 = vld [vmem:[%s188 + $0x18] sm:$0xff]
        %v228 = vld [vmem:[%s188 + $0x20] sm:$0xff]
        %v229 = vld [vmem:[%s188 + $0x28] sm:$0xff]
        %v230 = vld [vmem:[%s188 + $0x30] sm:$0xff]
        %v231 = vld [vmem:[%s188 + $0x38] sm:$0xff]
        %v232 = vld [vmem:[#allocation5] sm:$0xff]
        %v233 = vld [vmem:[#allocation5 + $0x8] sm:$0xff]
        %v234 = vld [vmem:[#allocation5 + $0x10] sm:$0xff]
        %v235 = vld [vmem:[#allocation5 + $0x18] sm:$0xff]
        %v236 = vld [vmem:[#allocation5 + $0x20] sm:$0xff]
        %v237 = vld [vmem:[#allocation5 + $0x28] sm:$0xff]
        %v238 = vld [vmem:[#allocation5 + $0x30] sm:$0xff]
        %v239 = vld [vmem:[#allocation5 + $0x38] sm:$0xff]
        %v240 = vld [vmem:[#allocation5 + $0x40] sm:$0xff]
        %v241 = vld [vmem:[#allocation5 + $0x48] sm:$0xff]
        %v242 = vld [vmem:[#allocation5 + $0x50] sm:$0xff]
        %v243 = vld [vmem:[#allocation5 + $0x58] sm:$0xff]
        %v244 = vld [vmem:[#allocation5 + $0x60] sm:$0xff]
        %v245 = vld [vmem:[#allocation5 + $0x68] sm:$0xff]
        %v246 = vld [vmem:[#allocation5 + $0x70] sm:$0xff]
        %v247 = vld [vmem:[#allocation5 + $0x78] sm:$0xff]
        %v248 = vld [vmem:[#allocation5 + $0x80] sm:$0xff]
        %v249 = vld [vmem:[#allocation5 + $0x88] sm:$0xff]
        %v250 = vld [vmem:[#allocation5 + $0x90] sm:$0xff]
        %v251 = vld [vmem:[#allocation5 + $0x98] sm:$0xff]
        %v252 = vld [vmem:[#allocation5 + $0xa0] sm:$0xff]
        %v253 = vld [vmem:[#allocation5 + $0xa8] sm:$0xff]
        %v254 = vld [vmem:[#allocation5 + $0xb0] sm:$0xff]
        %v255 = vld [vmem:[#allocation5 + $0xb8] sm:$0xff]
        %v256 = vld [vmem:[#allocation5 + $0xc0] sm:$0xff]
        %v257 = vld [vmem:[#allocation5 + $0xc8] sm:$0xff]
        %v258 = vld [vmem:[#allocation5 + $0xd0] sm:$0xff]
        %v259 = vld [vmem:[#allocation5 + $0xd8] sm:$0xff]
        %v260 = vld [vmem:[#allocation5 + $0xe0] sm:$0xff]
        %v261 = vld [vmem:[#allocation5 + $0xe8] sm:$0xff]
        %v262 = vld [vmem:[#allocation5 + $0xf0] sm:$0xff]
        %v263 = vld [vmem:[#allocation5 + $0xf8] sm:$0xff]
        %v264 = vld [vmem:[#allocation7] sm:$0x3]
        %v266 = vperm.slane %v264, 0
        %v267 = vperm.slane %v264, 1
        %270 = vmatpush.msra.mxu0 %v262
        %271 = vmatpush.msra.mxu0 %v260
        %272 = vmatpush.msra.mxu0 %v258
        %273 = vmatpush.msra.mxu0 %v256
        %274 = vmatpush.msra.mxu0 %v254
        %275 = vmatpush.msra.mxu0 %v252
        %276 = vmatpush.msra.mxu0 %v250
        %277 = vmatpush.msra.mxu0 %v248
        %278 = vmatpush.msra.mxu0 %v246
        %279 = vmatpush.msra.mxu0 %v244
        %280 = vmatpush.msra.mxu0 %v242
        %281 = vmatpush.msra.mxu0 %v240
        %282 = vmatpush.msra.mxu0 %v238
        %283 = vmatpush.msra.mxu0 %v236
        %284 = vmatpush.msra.mxu0 %v234
        %285 = vmatpush.msra.mxu0 %v232
        %286 = vmatmul.f32.gmra.mxu0 %v224
        %v287 = vpop.f32.mrf.mxu0
        %v288 = vadd.f32 %v266, %v287
        %289 = vmatmul.f32.gmra.mxu0 %v225
        %v290 = vpop.f32.mrf.mxu0
        %v291 = vadd.f32 %v266, %v290
        %292 = vmatmul.f32.gmra.mxu0 %v226
        %v293 = vpop.f32.mrf.mxu0
        %v294 = vadd.f32 %v266, %v293
        %295 = vmatmul.f32.gmra.mxu0 %v227
        %v296 = vpop.f32.mrf.mxu0
        %v297 = vadd.f32 %v266, %v296
        %298 = vmatmul.f32.gmra.mxu0 %v228
        %v299 = vpop.f32.mrf.mxu0
        %v300 = vadd.f32 %v266, %v299
        %301 = vmatmul.f32.gmra.mxu0 %v229
        %v302 = vpop.f32.mrf.mxu0
        %v303 = vadd.f32 %v266, %v302
        %304 = vmatmul.f32.gmra.mxu0 %v230
        %v305 = vpop.f32.mrf.mxu0
        %v306 = vadd.f32 %v266, %v305
        %307 = vmatmul.f32.gmra.mxu0 %v231
        %v308 = vpop.f32.mrf.mxu0
        %v309 = vadd.f32 %v266, %v308
        %310 = vdwg.mxu0
        %311 = vmatpush.msra.mxu0 %v263
        %312 = vmatpush.msra.mxu0 %v261
        %313 = vmatpush.msra.mxu0 %v259
        %314 = vmatpush.msra.mxu0 %v257
        %315 = vmatpush.msra.mxu0 %v255
        %316 = vmatpush.msra.mxu0 %v253
        %317 = vmatpush.msra.mxu0 %v251
        %318 = vmatpush.msra.mxu0 %v249
        %319 = vmatpush.msra.mxu0 %v247
        %320 = vmatpush.msra.mxu0 %v245
        %321 = vmatpush.msra.mxu0 %v243
        %322 = vmatpush.msra.mxu0 %v241
        %323 = vmatpush.msra.mxu0 %v239
        %324 = vmatpush.msra.mxu0 %v237
        %325 = vmatpush.msra.mxu0 %v235
        %326 = vmatpush.msra.mxu0 %v233
        %327 = vmatmul.f32.gmra.mxu0 %v224
        %v328 = vpop.f32.mrf.mxu0
        %v329 = vadd.f32 %v267, %v328
        %330 = vmatmul.f32.gmra.mxu0 %v225
        %v331 = vpop.f32.mrf.mxu0
        %v332 = vadd.f32 %v267, %v331
        %333 = vmatmul.f32.gmra.mxu0 %v226
        %v334 = vpop.f32.mrf.mxu0
        %v335 = vadd.f32 %v267, %v334
        %336 = vmatmul.f32.gmra.mxu0 %v227
        %v337 = vpop.f32.mrf.mxu0
        %v338 = vadd.f32 %v267, %v337
        %339 = vmatmul.f32.gmra.mxu0 %v228
        %v340 = vpop.f32.mrf.mxu0
        %v341 = vadd.f32 %v267, %v340
        %342 = vmatmul.f32.gmra.mxu0 %v229
        %v343 = vpop.f32.mrf.mxu0
        %v344 = vadd.f32 %v267, %v343
        %345 = vmatmul.f32.gmra.mxu0 %v230
        %v346 = vpop.f32.mrf.mxu0
        %v347 = vadd.f32 %v267, %v346
        %348 = vmatmul.f32.gmra.mxu0 %v231
        %v349 = vpop.f32.mrf.mxu0
        %v350 = vadd.f32 %v267, %v349
        %351 = vdwg.mxu0
        %352 = vst [vmem:[%s221] sm:$0xff] %v288
        %353 = vst [vmem:[%s221 + $0x8] sm:$0xff] %v329
        %354 = vst [vmem:[%s221 + $0x10] sm:$0xff] %v291
        %355 = vst [vmem:[%s221 + $0x18] sm:$0xff] %v332
        %356 = vst [vmem:[%s221 + $0x20] sm:$0xff] %v294
        %357 = vst [vmem:[%s221 + $0x28] sm:$0xff] %v335
        %358 = vst [vmem:[%s221 + $0x30] sm:$0xff] %v297
        %359 = vst [vmem:[%s221 + $0x38] sm:$0xff] %v338
        %360 = vst [vmem:[%s221 + $0x40] sm:$0xff] %v300
        %361 = vst [vmem:[%s221 + $0x48] sm:$0xff] %v341
        %362 = vst [vmem:[%s221 + $0x50] sm:$0xff] %v303
        %363 = vst [vmem:[%s221 + $0x58] sm:$0xff] %v344
        %364 = vst [vmem:[%s221 + $0x60] sm:$0xff] %v306
        %365 = vst [vmem:[%s221 + $0x68] sm:$0xff] %v347
        %366 = vst [vmem:[%s221 + $0x70] sm:$0xff] %v309
        %367 = vst [vmem:[%s221 + $0x78] sm:$0xff] %v350
        %s368 = sand.u32 %s97, 1
        %s369 = scalar_lea.sflag [#allocation4], %s368
        %s370 = sand.u32 %s97, 1
        %s371 = smul.addr %s370, 128
        %s372 = scalar_lea.vmem [#allocation8], %s371
        // Predicated region
        $region45: #{tpu_custom_call.1} parent=31 // pred_check
          %p373 = pneg %p107
        $region46: #{tpu_custom_call.1} parent=31 // pred_check_branch
          %375 = sbr.rel (%p373) target = $region48
        $region47: #{tpu_custom_call.1} parent=31 // pred_region
          %s376 = smul.u32 8, %s21
          %378 = vsyncadd %s369, 0
          %s379 = smul.addr %s376, 2
          %s380 = smul.addr %s379, 8
          %s381 = scalar_lea.hbm %s3, %s380
          %s382 = sshll.u32 %s372, 4
          %s383 = int_to_ptr.vmem [resolvable:$true] %s382
          %s384 = sshll.u32 %s381, 4
          %s385 = int_to_ptr.hbm [resolvable:$true] %s384
          %390 = dma.vmem_to_hbm [thread:$0]  %s383, 2048, %s385, %s369, 256, 256, 16
        $region48: #{tpu_custom_call.1} parent=31 // pred_fallthru
          _
      $region32: #{tpu_custom_call.1} parent=5 // pred_fallthru
        _
      %p391 = scmp.le.s32.totalorder 2, %s16
      // Predicated region
      $region49: #{tpu_custom_call.1} parent=5 // pred_check
        %p392 = pneg %p391
      $region50: #{tpu_custom_call.1} parent=5 // pred_check_branch
        %394 = sbr.rel (%p392) target = $region52
      $region51: #{tpu_custom_call.1} parent=5 // pred_region
        %s395 = ssub.s32 %s16, 2
        // Predicated region
        $region53: #{tpu_custom_call.1} parent=51 // pred_check
          %p396 = pneg %p113
        $region54: #{tpu_custom_call.1} parent=51 // pred_check_branch
          %398 = sbr.rel (%p396) target = $region56
        $region55: #{tpu_custom_call.1} parent=51 // pred_region
          %s399 = sand.u32 %s98, 1
          %s400 = scalar_lea.sflag [#allocation4], %s399
          %s401 = sand.u32 %s98, 1
          %s402 = smul.addr %s401, 128
          %s403 = scalar_lea.vmem [#allocation8], %s402
          %405 = dma.done %s400, 2048
        $region56: #{tpu_custom_call.1} parent=51 // pred_fallthru
          _
      $region52: #{tpu_custom_call.1} parent=5 // pred_fallthru
        _
    $region6: #{tpu_custom_call.1} parent=1 // loop_footer
      %s20 = sadd.s32 1, %s16
    $region7: #{tpu_custom_call.1} parent=1 // loop_footer_branch
      %15 = sbr.rel target = $region3
    $region8: #{tpu_custom_call.1} parent=1 // loop_exit
      _
    %406 = vsyncpa [#allocation3], 1
    %s407 = scalar_lea.sflag [#allocation3], 1
    %408 = vsyncpa %s407, 1
    %409 = vsyncpa [#allocation6], 1
    %410 = vsyncpa [#allocation4], 1
    %s411 = scalar_lea.sflag [#allocation4], 1
    %412 = vsyncpa %s411, 1

</llo_original>
